<compile_context>
chip_gen: v6e
topology: v6e:2x2x1
jax: 0.10.0
libtpu: 0.0.40
codegen_flags: <defaults>
</compile_context>

<pallas_src>
import jax
import jax.numpy as jnp
from jax.experimental import pallas as pl
from jax.experimental.pallas import tpu as pltpu


def _linear_kernel(x_ref, w_ref, b_ref, o_ref):
    # x_ref: (tb, F)   w_ref: (F, C)   b_ref: (1, C) f32   o_ref: (tb, C)
    acc = jnp.dot(x_ref[...], w_ref[...], preferred_element_type=jnp.float32)
    o_ref[...] = (acc + b_ref[...]).astype(o_ref.dtype)


def _choose_tile_rows(B, F, C, itemsize, *, target_step_bytes):
    """Pick the batch tile so each grid step streams ~target_step_bytes of HBM."""
    try:
        phys_vmem = pltpu.get_tpu_info().vmem_capacity_bytes
    except Exception:
        phys_vmem = 64 << 20  # assume the smallest (v7x per-core) if query fails

    if B <= 8:
        # Tiny batch: single full-extent block, nothing to tile or pipeline.
        return B, phys_vmem

    row_bytes = (F + C) * itemsize                 # streamed bytes per batch row
    tb = max(8, target_step_bytes // row_bytes)

    # VMEM budget: double-buffered x and out tiles + resident weight/bias
    # (budgeted as 2 copies of W in case single-buffering is unavailable).
    resident = 2 * (F * C + C) * itemsize
    budget = int(phys_vmem * 0.40) - resident
    if budget > 0:
        tb = min(tb, budget // (2 * row_bytes))

    b_aligned = ((B + 7) // 8) * 8
    tb = min(tb, b_aligned)
    # Keep >=2 grid blocks when possible so the "parallel" batch axis can be
    # sharded across both TensorCores on v7x (harmless on single-TC v5e/v6e).
    if b_aligned >= 16:
        half = (((B + 1) // 2) + 7) // 8 * 8
        tb = min(tb, half)
    tb = max(8, (tb // 8) * 8)
    return int(tb), phys_vmem


def _build_call(B, F, C, tb, out_dtype, vmem_limit, *, single_buffer_params):
    res_kw = {"pipeline_mode": pl.Buffered(1)} if single_buffer_params else {}
    return pl.pallas_call(
        _linear_kernel,
        out_shape=jax.ShapeDtypeStruct((B, C), out_dtype),
        grid_spec=pl.GridSpec(
            grid=(pl.cdiv(B, tb),),
            in_specs=[
                # Activations: tiled over batch, double-buffered by the pipeline.
                pl.BlockSpec((tb, F), lambda i: (i, 0)),
                # Weight / bias: constant block index -> VMEM-resident across tiles.
                pl.BlockSpec((F, C), lambda i: (0, 0), **res_kw),
                pl.BlockSpec((1, C), lambda i: (0, 0), **res_kw),
            ],
            out_specs=pl.BlockSpec((tb, C), lambda i: (i, 0)),
        ),
        compiler_params=pltpu.CompilerParams(
            dimension_semantics=("parallel",),   # batch tiles -> both TCs on v7x
            vmem_limit_bytes=vmem_limit,
        ),
    )


def log_reg_forward(fts, weight, bias, *, target_step_bytes=4 << 20):
    """PyTorch nn.Linear semantics: fts @ weight.T + bias.

    fts:    (..., F)  float32 or bfloat16
    weight: (C, F)    PyTorch nn.Linear layout
    bias:   (C,)
    Returns (..., C) in fts.dtype.
    """
    orig_shape = fts.shape
    F = orig_shape[-1]
    C = weight.shape[0]
    x = fts.reshape(-1, F)           # metadata-only for contiguous leading dims
    B = x.shape[0]
    itemsize = jnp.dtype(x.dtype).itemsize

    # One-time, tiny wrapper-side prep: transpose W to (F, C); bias stays f32.
    w_t = jnp.asarray(weight, dtype=x.dtype).T
    b_row = jnp.asarray(bias, dtype=jnp.float32).reshape(1, C)

    tb, phys_vmem = _choose_tile_rows(
        B, F, C, itemsize, target_step_bytes=target_step_bytes)

    working_set = 2 * tb * (F + C) * itemsize + 2 * (F * C + C) * itemsize
    vmem_limit = int(min(0.9 * phys_vmem, max(32 << 20, 2 * working_set)))

    try:
        call = _build_call(B, F, C, tb, x.dtype, vmem_limit,
                           single_buffer_params=True)
        out = call(x, w_t, b_row)
    except Exception:
        # pipeline_mode=pl.Buffered(1) unsupported on this jax/backend:
        # fall back to default double buffering (weight is small; minor VMEM cost).
        call = _build_call(B, F, C, tb, x.dtype, vmem_limit,
                           single_buffer_params=False)
        out = call(x, w_t, b_row)

    return out.reshape(*orig_shape[:-1], C)


if __name__ == "__main__":
    key = jax.random.PRNGKey(0)
    k_x, k_w, k_b = jax.random.split(key, 3)

    batch = 8
    fts_dim = 32
    nb_classes = 10

    fts = jax.random.normal(k_x, (batch, fts_dim), dtype=jnp.float32)
    # Deterministic "init" mimicking nn.Linear's uniform(-1/sqrt(F), 1/sqrt(F)).
    bound = 1.0 / (fts_dim ** 0.5)
    weight = jax.random.uniform(
        k_w, (nb_classes, fts_dim), minval=-bound, maxval=bound,
        dtype=jnp.float32)
    bias = jax.random.uniform(
        k_b, (nb_classes,), minval=-bound, maxval=bound, dtype=jnp.float32)

    out = jax.block_until_ready(log_reg_forward(fts, weight, bias))

    # Reference check in plain JAX (PyTorch nn.Linear semantics).
    ref = fts @ weight.T + bias
    assert out.shape == (batch, nb_classes)
    assert jnp.allclose(out, ref, atol=1e-5, rtol=1e-5)

    # NOTE: at toy shapes this is a single grid step (pure launch overhead);
    # the tiled pipeline only earns its keep at large batch.
    print("KERNEL_OK")
</pallas_src>

<mosaic_0001>
module attributes {stable_mosaic.version = 11 : i64} {
  func.func @_linear_kernel(%arg0: i32, %arg1: memref<8x32xf32, #tpu.memory_space<vmem>>, %arg2: memref<32x10xf32, #tpu.memory_space<vmem>>, %arg3: memref<1x10xf32, #tpu.memory_space<vmem>>, %arg4: memref<8x10xf32, #tpu.memory_space<vmem>>) attributes {dimension_semantics = [#tpu.dimension_semantics<parallel>], iteration_bounds = array<i64: 1>, scalar_prefetch = 0 : i64, scratch_operands = 0 : i64, tpu.core_type = #tpu.core_type<tc>, window_params = [{transform_indices = @transform_0, window_bounds = array<i64: 8, 32>}, {pipeline_mode = #tpu.pipeline_mode<synchronous>, transform_indices = @transform_1, window_bounds = array<i64: 32, 10>}, {pipeline_mode = #tpu.pipeline_mode<synchronous>, transform_indices = @transform_2, window_bounds = array<i64: 1, 10>}, {transform_indices = @transform_3, window_bounds = array<i64: 8, 10>}]} {
    %c0 = arith.constant 0 : index
    %c0_0 = arith.constant 0 : index
    %0 = vector.load %arg1[%c0, %c0_0] : memref<8x32xf32, #tpu.memory_space<vmem>>, vector<8x32xf32>
    %c0_1 = arith.constant 0 : index
    %c0_2 = arith.constant 0 : index
    %1 = vector.load %arg2[%c0_1, %c0_2] : memref<32x10xf32, #tpu.memory_space<vmem>>, vector<32x10xf32>
    %cst = arith.constant dense<0.000000e+00> : vector<8x10xf32>
    %2 = tpu.matmul %0, %1, %cst {dimension_numbers = #tpu.dot_dimension_numbers<[1], [0], [0], [1], [0, 0, 1, 1], [], []>} : vector<8x32xf32>, vector<32x10xf32>, vector<8x10xf32> -> vector<8x10xf32>
    %c0_3 = arith.constant 0 : index
    %c0_4 = arith.constant 0 : index
    %3 = vector.load %arg3[%c0_3, %c0_4] : memref<1x10xf32, #tpu.memory_space<vmem>>, vector<1x10xf32>
    %4 = vector.broadcast %3 : vector<1x10xf32> to vector<8x10xf32>
    %5 = arith.addf %2, %4 : vector<8x10xf32>
    %c0_5 = arith.constant 0 : index
    %c0_6 = arith.constant 0 : index
    %6 = vector.load %arg4[%c0_5, %c0_6] : memref<8x10xf32, #tpu.memory_space<vmem>>, vector<8x10xf32>
    tpu.vector_store %arg4[%c0_5, %c0_6], %5 {strides = array<i32>} : memref<8x10xf32, #tpu.memory_space<vmem>>, vector<8x10xf32>,
    return
  }
  func.func @transform_0(%arg0: i32) -> (i32, i32) {
    %c0_i32 = arith.constant 0 : i32
    %c0_i32_0 = arith.constant 0 : i32
    return %arg0, %c0_i32 : i32, i32
  }
  func.func @transform_1(%arg0: i32) -> (i32, i32) {
    %c0_i32 = arith.constant 0 : i32
    %c0_i32_0 = arith.constant 0 : i32
    %c0_i32_1 = arith.constant 0 : i32
    return %c0_i32, %c0_i32_0 : i32, i32
  }
  func.func @transform_2(%arg0: i32) -> (i32, i32) {
    %c0_i32 = arith.constant 0 : i32
    %c0_i32_0 = arith.constant 0 : i32
    %c0_i32_1 = arith.constant 0 : i32
    return %c0_i32, %c0_i32_0 : i32, i32
  }
  func.func @transform_3(%arg0: i32) -> (i32, i32) {
    %c0_i32 = arith.constant 0 : i32
    %c0_i32_0 = arith.constant 0 : i32
    return %arg0, %c0_i32 : i32, i32
  }
}

module attributes {stable_mosaic.version = 11 : i64} {
  func.func @_linear_kernel(%arg0: i32, %arg1: memref<8x32xf32, #tpu.memory_space<vmem>>, %arg2: memref<32x10xf32, #tpu.memory_space<vmem>>, %arg3: memref<1x10xf32, #tpu.memory_space<vmem>>, %arg4: memref<8x10xf32, #tpu.memory_space<vmem>>) attributes {dimension_semantics = [#tpu.dimension_semantics<parallel>], iteration_bounds = array<i64: 1>, scalar_prefetch = 0 : i64, scratch_operands = 0 : i64, tpu.core_type = #tpu.core_type<tc>, window_params = [{transform_indices = @transform_0, window_bounds = array<i64: 8, 32>}, {pipeline_mode = #tpu.pipeline_mode<synchronous>, transform_indices = @transform_1, window_bounds = array<i64: 32, 10>}, {pipeline_mode = #tpu.pipeline_mode<synchronous>, transform_indices = @transform_2, window_bounds = array<i64: 1, 10>}, {transform_indices = @transform_3, window_bounds = array<i64: 8, 10>}]} {
    %c0 = arith.constant 0 : index
    %c0_0 = arith.constant 0 : index
    %0 = vector.load %arg1[%c0, %c0_0] : memref<8x32xf32, #tpu.memory_space<vmem>>, vector<8x32xf32>
    %c0_1 = arith.constant 0 : index
    %c0_2 = arith.constant 0 : index
    %1 = vector.load %arg2[%c0_1, %c0_2] : memref<32x10xf32, #tpu.memory_space<vmem>>, vector<32x10xf32>
    %cst = arith.constant dense<0.000000e+00> : vector<8x10xf32>
    %2 = tpu.matmul %0, %1, %cst {dimension_numbers = #tpu.dot_dimension_numbers<[1], [0], [0], [1], [0, 0, 1, 1], [], []>} : vector<8x32xf32>, vector<32x10xf32>, vector<8x10xf32> -> vector<8x10xf32>
    %c0_3 = arith.constant 0 : index
    %c0_4 = arith.constant 0 : index
    %3 = vector.load %arg3[%c0_3, %c0_4] : memref<1x10xf32, #tpu.memory_space<vmem>>, vector<1x10xf32>
    %4 = vector.broadcast %3 : vector<1x10xf32> to vector<8x10xf32>
    %5 = arith.addf %2, %4 : vector<8x10xf32>
    %c0_5 = arith.constant 0 : index
    %c0_6 = arith.constant 0 : index
    %6 = vector.load %arg4[%c0_5, %c0_6] : memref<8x10xf32, #tpu.memory_space<vmem>>, vector<8x10xf32>
    tpu.vector_store %arg4[%c0_5, %c0_6], %5 {strides = array<i32>} : memref<8x10xf32, #tpu.memory_space<vmem>>, vector<8x10xf32>,
    return
  }
  func.func @transform_0(%arg0: i32) -> (i32, i32) {
    %c0_i32 = arith.constant 0 : i32
    %c0_i32_0 = arith.constant 0 : i32
    return %arg0, %c0_i32 : i32, i32
  }
  func.func @transform_1(%arg0: i32) -> (i32, i32) {
    %c0_i32 = arith.constant 0 : i32
    %c0_i32_0 = arith.constant 0 : i32
    %c0_i32_1 = arith.constant 0 : i32
    return %c0_i32, %c0_i32_0 : i32, i32
  }
  func.func @transform_2(%arg0: i32) -> (i32, i32) {
    %c0_i32 = arith.constant 0 : i32
    %c0_i32_0 = arith.constant 0 : i32
    %c0_i32_1 = arith.constant 0 : i32
    return %c0_i32, %c0_i32_0 : i32, i32
  }
  func.func @transform_3(%arg0: i32) -> (i32, i32) {
    %c0_i32 = arith.constant 0 : i32
    %c0_i32_0 = arith.constant 0 : i32
    return %arg0, %c0_i32 : i32, i32
  }
}

</mosaic_0001>

<llo_original>
// kernel: tpu_custom_call.1
$region0: #{tpu_custom_call.1}
  #allocation0 [shape = 'u32[]', space=smem, size = 0x4, offset = 0x4, fixed_abs, tag = 'smem constant byte address 0x4 - core index']
  #allocation1 [shape = 'u32[144,128]{1,0:T(1,128)}', space=vmem, size = 0x12000, scoped, tag = 'internal scratch']
  %s0 = inlined_call_operand.vmem [shape: f32[8,32], index: 0, kind: input, shape index: {}]
  %s1 = inlined_call_operand.vmem [shape: f32[32,10], index: 1, kind: input, shape index: {}]
  %s2 = inlined_call_operand.vmem [shape: f32[1,10], index: 2, kind: input, shape index: {}]
  %s3 = inlined_call_operand.hbm [shape: f32[8,10], index: 3, kind: output, shape index: {}]
  %s4 = sld [smem:[#allocation0]]
  $region22: #{tpu_custom_call.1} parent=0
    _
  %s6 = ssub.s32 1, %s4
  %s7 = scalar_select 0, %s6, %s4
  $region1: #{tpu_custom_call.1} parent=0
    #allocation2 [shape = 'u8[4096]{0}', space=vmem, size = 0x1000, scoped, tag = 'output window, operand 0, single buffered']
    #allocation3 [shape = 's32[1]{0}', space=sflag, size = 0x4, scoped, tag = 'scoped memory for tpu_custom_call.1']
    %8 = vsyncpa [#allocation3], 0
    // Predicated region
    $region2: #{tpu_custom_call.1} parent=1 // pred_check
      _
    $region3: #{tpu_custom_call.1} parent=1 // pred_check_branch
      %10 = sbr.rel (0) target = $region5
    $region4: #{tpu_custom_call.1} parent=1 // pred_region
      _
    $region5: #{tpu_custom_call.1} parent=1 // pred_fallthru
      _
    // Predicated region
    $region6: #{tpu_custom_call.1} parent=1 // pred_check
      _
    $region7: #{tpu_custom_call.1} parent=1 // pred_check_branch
      %12 = sbr.rel (0) target = $region9
    $region8: #{tpu_custom_call.1} parent=1 // pred_region
      _
    $region9: #{tpu_custom_call.1} parent=1 // pred_fallthru
      _
    // Predicated region
    $region10: #{tpu_custom_call.1} parent=1 // pred_check
      _
    $region11: #{tpu_custom_call.1} parent=1 // pred_check_branch
      %14 = sbr.rel (0) target = $region13
    $region12: #{tpu_custom_call.1} parent=1 // pred_region
      _
    $region13: #{tpu_custom_call.1} parent=1 // pred_fallthru
      _
    %v15 = vld [vmem:[%s0] sm:$0xff]
    %v16 = vld [vmem:[%s1] sm:$0xff]
    %v17 = vld [vmem:[%s1 + $0x8] sm:$0xff]
    %v18 = vld [vmem:[%s1 + $0x10] sm:$0xff]
    %v19 = vld [vmem:[%s1 + $0x18] sm:$0xff]
    %v20 = vld [vmem:[%s2] sm:$0x1]
    %v22 = vlaneseq
    %v23 = vshrl.u32 %v22, 7
    %v24 = vsub.s32 0, %v23
    %v25 = vrot.slane %v20, %v24
    %vm27 = vcmask 261120
    %v29 = vsel %vm27, %v15, 0
    %31 = vmatprep.subr.mxu0 0.0
    %32 = vmatpush1.msra.mxu0 0.0
    %33 = vmatprep.subr.mxu0 0.0
    %34 = vmatpush1.msra.mxu0 0.0
    %35 = vmatprep.subr.mxu0 0.0
    %36 = vmatpush1.msra.mxu0 0.0
    %37 = vmatprep.subr.mxu0 0.0
    %38 = vmatpush1.msra.mxu0 0.0
    %39 = vmatprep.subr.mxu0 0.0
    %40 = vmatpush1.msra.mxu0 0.0
    %41 = vmatprep.subr.mxu0 0.0
    %42 = vmatpush1.msra.mxu0 0.0
    %43 = vmatprep.subr.mxu0 0.0
    %44 = vmatpush1.msra.mxu0 0.0
    %45 = vmatprep.subr.mxu0 0.0
    %46 = vmatpush1.msra.mxu0 0.0
    %47 = vmatprep.subr.mxu0 0.0
    %48 = vmatpush1.msra.mxu0 0.0
    %49 = vmatprep.subr.mxu0 0.0
    %50 = vmatpush1.msra.mxu0 0.0
    %51 = vmatprep.subr.mxu0 0.0
    %52 = vmatpush1.msra.mxu0 0.0
    %53 = vmatprep.subr.mxu0 0.0
    %54 = vmatpush1.msra.mxu0 0.0
    %55 = vmatprep.subr.mxu0 0.0
    %56 = vmatpush1.msra.mxu0 %v19
    %57 = vmatprep.subr.mxu0 0.0
    %58 = vmatpush1.msra.mxu0 %v18
    %59 = vmatprep.subr.mxu0 0.0
    %60 = vmatpush1.msra.mxu0 %v17
    %61 = vmatprep.subr.mxu0 0.0
    %62 = vmatpush1.msra.mxu0 %v16
    %63 = vmatprep.subr.mxu0 0.0
    %64 = vmatpush2.msra.mxu0 0.0
    %65 = vmatprep.subr.mxu0 0.0
    %66 = vmatpush2.msra.mxu0 0.0
    %67 = vmatprep.subr.mxu0 0.0
    %68 = vmatpush2.msra.mxu0 0.0
    %69 = vmatprep.subr.mxu0 0.0
    %70 = vmatpush2.msra.mxu0 0.0
    %71 = vmatprep.subr.mxu0 0.0
    %72 = vmatpush2.msra.mxu0 0.0
    %73 = vmatprep.subr.mxu0 0.0
    %74 = vmatpush2.msra.mxu0 0.0
    %75 = vmatprep.subr.mxu0 0.0
    %76 = vmatpush2.msra.mxu0 0.0
    %77 = vmatprep.subr.mxu0 0.0
    %78 = vmatpush2.msra.mxu0 0.0
    %79 = vmatprep.subr.mxu0 0.0
    %80 = vmatpush2.msra.mxu0 0.0
    %81 = vmatprep.subr.mxu0 0.0
    %82 = vmatpush2.msra.mxu0 0.0
    %83 = vmatprep.subr.mxu0 0.0
    %84 = vmatpush2.msra.mxu0 0.0
    %85 = vmatprep.subr.mxu0 0.0
    %86 = vmatpush2.msra.mxu0 0.0
    %87 = vmatprep.subr.mxu0 0.0
    %88 = vmatpush2.msra.mxu0 0.0
    %89 = vmatprep.subr.mxu0 0.0
    %90 = vmatpush2.msra.mxu0 0.0
    %91 = vmatprep.subr.mxu0 0.0
    %92 = vmatpush2.msra.mxu0 0.0
    %93 = vmatprep.subr.mxu0 0.0
    %94 = vmatpush2.msra.mxu0 0.0
    %95 = vmatprep.mubr.f32.mxu0 0.0
    %96 = vmatmul.mubr.f32.gmra.mxu0 %v29
    %v97 = vpop.f32.mrf.mxu0
    %v98 = vadd.f32 %v25, %v97
    %v99 = vpop.f32.mrf.mxu0
    %100 = vdwg.mxu0
    %vm101 = vcmask 80896
    %102 = vst.msk [vmem:[#allocation2] sm:$0xff] %vm101, %v98
    // Predicated region
    $region14: #{tpu_custom_call.1} parent=1 // pred_check
      _
    $region15: #{tpu_custom_call.1} parent=1 // pred_check_branch
      %104 = sbr.rel (0) target = $region17
    $region16: #{tpu_custom_call.1} parent=1 // pred_region
      %s106 = ssub.s32 128, 128
      %107 = vsyncadd [#allocation3], %s106
      %s109 = sshll.u32 [#allocation2], 4
      %s110 = int_to_ptr.vmem [resolvable:$true] %s109
      %112 = dma.vmem_to_hbm [thread:$0]  %s110, 128, %s3, [#allocation3]
    $region17: #{tpu_custom_call.1} parent=1 // pred_fallthru
      _
    // Predicated region
    $region18: #{tpu_custom_call.1} parent=1 // pred_check
      _
    $region19: #{tpu_custom_call.1} parent=1 // pred_check_branch
      %114 = sbr.rel (0) target = $region21
    $region20: #{tpu_custom_call.1} parent=1 // pred_region
      %115 = dma.done [#allocation3], 128
    $region21: #{tpu_custom_call.1} parent=1 // pred_fallthru
      _
    %116 = vsyncpa [#allocation3], 1

// kernel: tpu_custom_call.1
$region0: #{tpu_custom_call.1}
  #allocation0 [shape = 'u32[]', space=smem, size = 0x4, offset = 0x4, fixed_abs, tag = 'smem constant byte address 0x4 - core index']
  #allocation1 [shape = 'u32[144,128]{1,0:T(1,128)}', space=vmem, size = 0x12000, scoped, tag = 'internal scratch']
  %s0 = inlined_call_operand.vmem [shape: f32[8,32], index: 0, kind: input, shape index: {}]
  %s1 = inlined_call_operand.vmem [shape: f32[32,10], index: 1, kind: input, shape index: {}]
  %s2 = inlined_call_operand.vmem [shape: f32[1,10], index: 2, kind: input, shape index: {}]
  %s3 = inlined_call_operand.hbm [shape: f32[8,10], index: 3, kind: output, shape index: {}]
  %s4 = sld [smem:[#allocation0]]
  $region22: #{tpu_custom_call.1} parent=0
    _
  %s6 = ssub.s32 1, %s4
  %s7 = scalar_select 0, %s6, %s4
  $region1: #{tpu_custom_call.1} parent=0
    #allocation2 [shape = 'u8[4096]{0}', space=vmem, size = 0x1000, scoped, tag = 'output window, operand 0, single buffered']
    #allocation3 [shape = 's32[1]{0}', space=sflag, size = 0x4, scoped, tag = 'scoped memory for tpu_custom_call.1']
    %8 = vsyncpa [#allocation3], 0
    // Predicated region
    $region2: #{tpu_custom_call.1} parent=1 // pred_check
      _
    $region3: #{tpu_custom_call.1} parent=1 // pred_check_branch
      %10 = sbr.rel (0) target = $region5
    $region4: #{tpu_custom_call.1} parent=1 // pred_region
      _
    $region5: #{tpu_custom_call.1} parent=1 // pred_fallthru
      _
    // Predicated region
    $region6: #{tpu_custom_call.1} parent=1 // pred_check
      _
    $region7: #{tpu_custom_call.1} parent=1 // pred_check_branch
      %12 = sbr.rel (0) target = $region9
    $region8: #{tpu_custom_call.1} parent=1 // pred_region
      _
    $region9: #{tpu_custom_call.1} parent=1 // pred_fallthru
      _
    // Predicated region
    $region10: #{tpu_custom_call.1} parent=1 // pred_check
      _
    $region11: #{tpu_custom_call.1} parent=1 // pred_check_branch
      %14 = sbr.rel (0) target = $region13
    $region12: #{tpu_custom_call.1} parent=1 // pred_region
      _
    $region13: #{tpu_custom_call.1} parent=1 // pred_fallthru
      _
    %v15 = vld [vmem:[%s0] sm:$0xff]
    %v16 = vld [vmem:[%s1] sm:$0xff]
    %v17 = vld [vmem:[%s1 + $0x8] sm:$0xff]
    %v18 = vld [vmem:[%s1 + $0x10] sm:$0xff]
    %v19 = vld [vmem:[%s1 + $0x18] sm:$0xff]
    %v20 = vld [vmem:[%s2] sm:$0x1]
    %v22 = vlaneseq
    %v23 = vshrl.u32 %v22, 7
    %v24 = vsub.s32 0, %v23
    %v25 = vrot.slane %v20, %v24
    %vm27 = vcmask 261120
    %v29 = vsel %vm27, %v15, 0
    %31 = vmatprep.subr.mxu0 0.0
    %32 = vmatpush1.msra.mxu0 0.0
    %33 = vmatprep.subr.mxu0 0.0
    %34 = vmatpush1.msra.mxu0 0.0
    %35 = vmatprep.subr.mxu0 0.0
    %36 = vmatpush1.msra.mxu0 0.0
    %37 = vmatprep.subr.mxu0 0.0
    %38 = vmatpush1.msra.mxu0 0.0
    %39 = vmatprep.subr.mxu0 0.0
    %40 = vmatpush1.msra.mxu0 0.0
    %41 = vmatprep.subr.mxu0 0.0
    %42 = vmatpush1.msra.mxu0 0.0
    %43 = vmatprep.subr.mxu0 0.0
    %44 = vmatpush1.msra.mxu0 0.0
    %45 = vmatprep.subr.mxu0 0.0
    %46 = vmatpush1.msra.mxu0 0.0
    %47 = vmatprep.subr.mxu0 0.0
    %48 = vmatpush1.msra.mxu0 0.0
    %49 = vmatprep.subr.mxu0 0.0
    %50 = vmatpush1.msra.mxu0 0.0
    %51 = vmatprep.subr.mxu0 0.0
    %52 = vmatpush1.msra.mxu0 0.0
    %53 = vmatprep.subr.mxu0 0.0
    %54 = vmatpush1.msra.mxu0 0.0
    %55 = vmatprep.subr.mxu0 0.0
    %56 = vmatpush1.msra.mxu0 %v19
    %57 = vmatprep.subr.mxu0 0.0
    %58 = vmatpush1.msra.mxu0 %v18
    %59 = vmatprep.subr.mxu0 0.0
    %60 = vmatpush1.msra.mxu0 %v17
    %61 = vmatprep.subr.mxu0 0.0
    %62 = vmatpush1.msra.mxu0 %v16
    %63 = vmatprep.subr.mxu0 0.0
    %64 = vmatpush2.msra.mxu0 0.0
    %65 = vmatprep.subr.mxu0 0.0
    %66 = vmatpush2.msra.mxu0 0.0
    %67 = vmatprep.subr.mxu0 0.0
    %68 = vmatpush2.msra.mxu0 0.0
    %69 = vmatprep.subr.mxu0 0.0
    %70 = vmatpush2.msra.mxu0 0.0
    %71 = vmatprep.subr.mxu0 0.0
    %72 = vmatpush2.msra.mxu0 0.0
    %73 = vmatprep.subr.mxu0 0.0
    %74 = vmatpush2.msra.mxu0 0.0
    %75 = vmatprep.subr.mxu0 0.0
    %76 = vmatpush2.msra.mxu0 0.0
    %77 = vmatprep.subr.mxu0 0.0
    %78 = vmatpush2.msra.mxu0 0.0
    %79 = vmatprep.subr.mxu0 0.0
    %80 = vmatpush2.msra.mxu0 0.0
    %81 = vmatprep.subr.mxu0 0.0
    %82 = vmatpush2.msra.mxu0 0.0
    %83 = vmatprep.subr.mxu0 0.0
    %84 = vmatpush2.msra.mxu0 0.0
    %85 = vmatprep.subr.mxu0 0.0
    %86 = vmatpush2.msra.mxu0 0.0
    %87 = vmatprep.subr.mxu0 0.0
    %88 = vmatpush2.msra.mxu0 0.0
    %89 = vmatprep.subr.mxu0 0.0
    %90 = vmatpush2.msra.mxu0 0.0
    %91 = vmatprep.subr.mxu0 0.0
    %92 = vmatpush2.msra.mxu0 0.0
    %93 = vmatprep.subr.mxu0 0.0
    %94 = vmatpush2.msra.mxu0 0.0
    %95 = vmatprep.mubr.f32.mxu0 0.0
    %96 = vmatmul.mubr.f32.gmra.mxu0 %v29
    %v97 = vpop.f32.mrf.mxu0
    %v98 = vadd.f32 %v25, %v97
    %v99 = vpop.f32.mrf.mxu0
    %100 = vdwg.mxu0
    %vm101 = vcmask 80896
    %102 = vst.msk [vmem:[#allocation2] sm:$0xff] %vm101, %v98
    // Predicated region
    $region14: #{tpu_custom_call.1} parent=1 // pred_check
      _
    $region15: #{tpu_custom_call.1} parent=1 // pred_check_branch
      %104 = sbr.rel (0) target = $region17
    $region16: #{tpu_custom_call.1} parent=1 // pred_region
      %s106 = ssub.s32 128, 128
      %107 = vsyncadd [#allocation3], %s106
      %s109 = sshll.u32 [#allocation2], 4
      %s110 = int_to_ptr.vmem [resolvable:$true] %s109
      %112 = dma.vmem_to_hbm [thread:$0]  %s110, 128, %s3, [#allocation3]
    $region17: #{tpu_custom_call.1} parent=1 // pred_fallthru
      _
    // Predicated region
    $region18: #{tpu_custom_call.1} parent=1 // pred_check
      _
    $region19: #{tpu_custom_call.1} parent=1 // pred_check_branch
      %114 = sbr.rel (0) target = $region21
    $region20: #{tpu_custom_call.1} parent=1 // pred_region
      %115 = dma.done [#allocation3], 128
    $region21: #{tpu_custom_call.1} parent=1 // pred_fallthru
      _
    %116 = vsyncpa [#allocation3], 1

</llo_original>
